<compile_context>
chip_gen: v7x
topology: tpu7x:2x2x1
jax: 0.10.0
libtpu: 0.0.40
codegen_flags: <defaults>
</compile_context>

<pallas_src>
import jax
import jax.numpy as jnp
from jax.experimental import pallas as pl
from jax.experimental.pallas import tpu as pltpu

LANE = 128
SUBLANE = 8
NEG_BIG = -1e30  # bias for padded action columns -> exp underflows to exactly 0


def _round_up(x, m):
    return (x + m - 1) // m * m


def _sigmoid(h):
    # One EUP push (tanh) instead of exp + full-precision divide.
    return 0.5 * (jnp.tanh(0.5 * h) + 1.0)


def policy_mlp_kernel(x_ref, w1_ref, b1_ref, w2_ref, b2_ref, w3_ref, b3_ref,
                      out_ref):
    x = x_ref[...]  # f32 activations [TB, S]

    # fc1 + sigmoid  (bf16 MXU inputs, f32 accumulate)
    h1 = jnp.dot(x.astype(jnp.bfloat16), w1_ref[...],
                 preferred_element_type=jnp.float32) + b1_ref[...]
    h1 = _sigmoid(h1)

    # fc2 + sigmoid
    h2 = jnp.dot(h1.astype(jnp.bfloat16), w2_ref[...],
                 preferred_element_type=jnp.float32) + b2_ref[...]
    h2 = _sigmoid(h2)

    # fc3 (action axis padded to a lane-dense 128; pad columns carry -1e30 bias)
    logits = jnp.dot(h2.astype(jnp.bfloat16), w3_ref[...],
                     preferred_element_type=jnp.float32) + b3_ref[...]

    # Numerically stabilized softmax over the (padded) action axis.
    m = jnp.max(logits, axis=1, keepdims=True)
    e = jnp.exp(logits - m)
    denom = jnp.sum(e, axis=1, keepdims=True)
    out_ref[...] = (e * pl.reciprocal(denom, approx=True)).astype(out_ref.dtype)


@jax.jit
def policy_forward(x, params):
    """x: [B, state_space] float32. params: dict of (already transposed) weights/biases."""
    w1, b1 = params["w1"], params["b1"]
    w2, b2 = params["w2"], params["b2"]
    w3, b3 = params["w3"], params["b3"]

    B, S = x.shape
    H1 = w1.shape[1]          # 128
    H2 = w2.shape[1]          # 64
    A = w3.shape[1]           # action_space
    A_pad = _round_up(A, LANE)

    # Batch tiling: pad to a sublane multiple, up to 512 rows per grid step.
    B_pad = _round_up(B, SUBLANE)
    TB = min(512, B_pad)
    B_pad = _round_up(B_pad, TB)

    # Host-side layout prep (bf16 weights, lane-dense padded fc3, padded batch).
    x_p = jnp.zeros((B_pad, S), jnp.float32).at[:B, :].set(x.astype(jnp.float32))
    w1b = w1.astype(jnp.bfloat16)
    w2b = w2.astype(jnp.bfloat16)
    w3b = jnp.zeros((H2, A_pad), jnp.bfloat16).at[:, :A].set(w3.astype(jnp.bfloat16))
    b1f = b1.astype(jnp.float32)
    b2f = b2.astype(jnp.float32)
    b3f = jnp.full((1, A_pad), NEG_BIG, jnp.float32).at[:, :A].set(b3.astype(jnp.float32))

    grid = (B_pad // TB,)
    # Weights/biases: constant block index -> fetched once, resident across grid steps.
    const = lambda shape: pl.BlockSpec(shape, lambda i: (0,) * len(shape))

    out = pl.pallas_call(
        policy_mlp_kernel,
        out_shape=jax.ShapeDtypeStruct((B_pad, A_pad), jnp.float32),
        grid=grid,
        in_specs=[
            pl.BlockSpec((TB, S), lambda i: (i, 0)),
            const((S, H1)), const((1, H1)),
            const((H1, H2)), const((1, H2)),
            const((H2, A_pad)), const((1, A_pad)),
        ],
        out_specs=pl.BlockSpec((TB, A_pad), lambda i: (i, 0)),
        compiler_params=pltpu.CompilerParams(
            dimension_semantics=("parallel",)),
    )(x_p, w1b, b1f, w2b, b2f, w3b, b3f)

    return out[:B, :A]


def init_params(key, state_space, action_space):
    """Deterministic init mimicking nn.Linear's uniform(-1/sqrt(fan_in), ...)."""
    def linear(key, fan_in, fan_out):
        kw, kb = jax.random.split(key)
        bound = 1.0 / jnp.sqrt(fan_in)
        # Stored already transposed: [fan_in, fan_out] so kernel does x @ W.
        w = jax.random.uniform(kw, (fan_in, fan_out), jnp.float32, -bound, bound)
        b = jax.random.uniform(kb, (1, fan_out), jnp.float32, -bound, bound)
        return w, b

    k1, k2, k3 = jax.random.split(key, 3)
    w1, b1 = linear(k1, state_space, 128)
    w2, b2 = linear(k2, 128, 64)
    w3, b3 = linear(k3, 64, action_space)
    return {"w1": w1, "b1": b1, "w2": w2, "b2": b2, "w3": w3, "b3": b3}


if __name__ == "__main__":
    key = jax.random.PRNGKey(0)
    kp, kx = jax.random.split(key)

    batch = 2
    state_space = 16
    action_space = 6

    params = init_params(kp, state_space, action_space)
    x = jax.random.normal(kx, (batch, state_space), jnp.float32)

    probs = policy_forward(x, params)
    probs = jax.block_until_ready(probs)

    # Pure-JAX f32 reference for sanity.
    def ref(x, p):
        h1 = jax.nn.sigmoid(x @ p["w1"] + p["b1"])
        h2 = jax.nn.sigmoid(h1 @ p["w2"] + p["b2"])
        logits = h2 @ p["w3"] + p["b3"]
        return jax.nn.softmax(logits, axis=1)

    expected = ref(x, params)

    assert probs.shape == (batch, action_space)
    # Rows of a softmax sum to 1 (approx reciprocal + bf16 matmuls -> loose tol).
    assert bool(jnp.allclose(jnp.sum(probs, axis=1), 1.0, atol=3e-3))
    assert bool(jnp.allclose(probs, expected, atol=3e-2, rtol=3e-2))

    print("KERNEL_OK")
</pallas_src>

<mosaic_0001>
module attributes {stable_mosaic.version = 11 : i64} {
  func.func @policy_mlp_kernel(%arg0: i32, %arg1: memref<8x16xf32, #tpu.memory_space<vmem>>, %arg2: memref<16x128xbf16, #tpu.memory_space<vmem>>, %arg3: memref<1x128xf32, #tpu.memory_space<vmem>>, %arg4: memref<128x64xbf16, #tpu.memory_space<vmem>>, %arg5: memref<1x64xf32, #tpu.memory_space<vmem>>, %arg6: memref<64x128xbf16, #tpu.memory_space<vmem>>, %arg7: memref<1x128xf32, #tpu.memory_space<vmem>>, %arg8: memref<8x128xf32, #tpu.memory_space<vmem>>) attributes {dimension_semantics = [#tpu.dimension_semantics<parallel>], iteration_bounds = array<i64: 1>, scalar_prefetch = 0 : i64, scratch_operands = 0 : i64, tpu.core_type = #tpu.core_type<tc>, window_params = [{transform_indices = @transform_0, window_bounds = array<i64: 8, 16>}, {pipeline_mode = #tpu.pipeline_mode<synchronous>, transform_indices = @transform_1, window_bounds = array<i64: 16, 128>}, {pipeline_mode = #tpu.pipeline_mode<synchronous>, transform_indices = @transform_2, window_bounds = array<i64: 1, 128>}, {pipeline_mode = #tpu.pipeline_mode<synchronous>, transform_indices = @transform_3, window_bounds = array<i64: 128, 64>}, {pipeline_mode = #tpu.pipeline_mode<synchronous>, transform_indices = @transform_4, window_bounds = array<i64: 1, 64>}, {pipeline_mode = #tpu.pipeline_mode<synchronous>, transform_indices = @transform_5, window_bounds = array<i64: 64, 128>}, {pipeline_mode = #tpu.pipeline_mode<synchronous>, transform_indices = @transform_6, window_bounds = array<i64: 1, 128>}, {transform_indices = @transform_7, window_bounds = array<i64: 8, 128>}]} {
    %c0 = arith.constant 0 : index
    %c0_0 = arith.constant 0 : index
    %0 = vector.load %arg1[%c0, %c0_0] : memref<8x16xf32, #tpu.memory_space<vmem>>, vector<8x16xf32>
    %1 = arith.truncf %0 : vector<8x16xf32> to vector<8x16xbf16>
    %c0_1 = arith.constant 0 : index
    %c0_2 = arith.constant 0 : index
    %2 = vector.load %arg2[%c0_1, %c0_2] : memref<16x128xbf16, #tpu.memory_space<vmem>>, vector<16x128xbf16>
    %cst = arith.constant dense<0.000000e+00> : vector<8x128xf32>
    %3 = tpu.matmul %1, %2, %cst {dimension_numbers = #tpu.dot_dimension_numbers<[1], [0], [0], [1], [0, 0, 1, 1], [], []>} : vector<8x16xbf16>, vector<16x128xbf16>, vector<8x128xf32> -> vector<8x128xf32>
    %c0_3 = arith.constant 0 : index
    %c0_4 = arith.constant 0 : index
    %4 = vector.load %arg3[%c0_3, %c0_4] : memref<1x128xf32, #tpu.memory_space<vmem>>, vector<1x128xf32>
    %5 = vector.broadcast %4 : vector<1x128xf32> to vector<8x128xf32>
    %6 = arith.addf %3, %5 : vector<8x128xf32>
    %cst_5 = arith.constant 5.000000e-01 : f32
    %7 = vector.broadcast %cst_5 : f32 to vector<8x128xf32>
    %8 = arith.mulf %7, %6 : vector<8x128xf32>
    %9 = math.tanh %8 : vector<8x128xf32>
    %cst_6 = arith.constant 1.000000e+00 : f32
    %10 = vector.broadcast %cst_6 : f32 to vector<8x128xf32>
    %11 = arith.addf %9, %10 : vector<8x128xf32>
    %cst_7 = arith.constant 5.000000e-01 : f32
    %12 = vector.broadcast %cst_7 : f32 to vector<8x128xf32>
    %13 = arith.mulf %12, %11 : vector<8x128xf32>
    %14 = arith.truncf %13 : vector<8x128xf32> to vector<8x128xbf16>
    %c0_8 = arith.constant 0 : index
    %c0_9 = arith.constant 0 : index
    %15 = vector.load %arg4[%c0_8, %c0_9] : memref<128x64xbf16, #tpu.memory_space<vmem>>, vector<128x64xbf16>
    %cst_10 = arith.constant dense<0.000000e+00> : vector<8x64xf32>
    %16 = tpu.matmul %14, %15, %cst_10 {dimension_numbers = #tpu.dot_dimension_numbers<[1], [0], [0], [1], [0, 0, 1, 1], [], []>} : vector<8x128xbf16>, vector<128x64xbf16>, vector<8x64xf32> -> vector<8x64xf32>
    %c0_11 = arith.constant 0 : index
    %c0_12 = arith.constant 0 : index
    %17 = vector.load %arg5[%c0_11, %c0_12] : memref<1x64xf32, #tpu.memory_space<vmem>>, vector<1x64xf32>
    %18 = vector.broadcast %17 : vector<1x64xf32> to vector<8x64xf32>
    %19 = arith.addf %16, %18 : vector<8x64xf32>
    %cst_13 = arith.constant 5.000000e-01 : f32
    %20 = vector.broadcast %cst_13 : f32 to vector<8x64xf32>
    %21 = arith.mulf %20, %19 : vector<8x64xf32>
    %22 = math.tanh %21 : vector<8x64xf32>
    %cst_14 = arith.constant 1.000000e+00 : f32
    %23 = vector.broadcast %cst_14 : f32 to vector<8x64xf32>
    %24 = arith.addf %22, %23 : vector<8x64xf32>
    %cst_15 = arith.constant 5.000000e-01 : f32
    %25 = vector.broadcast %cst_15 : f32 to vector<8x64xf32>
    %26 = arith.mulf %25, %24 : vector<8x64xf32>
    %27 = arith.truncf %26 : vector<8x64xf32> to vector<8x64xbf16>
    %c0_16 = arith.constant 0 : index
    %c0_17 = arith.constant 0 : index
    %28 = vector.load %arg6[%c0_16, %c0_17] : memref<64x128xbf16, #tpu.memory_space<vmem>>, vector<64x128xbf16>
    %cst_18 = arith.constant dense<0.000000e+00> : vector<8x128xf32>
    %29 = tpu.matmul %27, %28, %cst_18 {dimension_numbers = #tpu.dot_dimension_numbers<[1], [0], [0], [1], [0, 0, 1, 1], [], []>} : vector<8x64xbf16>, vector<64x128xbf16>, vector<8x128xf32> -> vector<8x128xf32>
    %c0_19 = arith.constant 0 : index
    %c0_20 = arith.constant 0 : index
    %30 = vector.load %arg7[%c0_19, %c0_20] : memref<1x128xf32, #tpu.memory_space<vmem>>, vector<1x128xf32>
    %31 = vector.broadcast %30 : vector<1x128xf32> to vector<8x128xf32>
    %32 = arith.addf %29, %31 : vector<8x128xf32>
    %cst_21 = arith.constant dense<0xFF800000> : vector<8xf32>
    %33 = vector.multi_reduction <maximumf>, %32, %cst_21 [1] : vector<8x128xf32> to vector<8xf32>
    %34 = vector.shape_cast %33 : vector<8xf32> to vector<8x1xf32>
    %35 = vector.broadcast %34 : vector<8x1xf32> to vector<8x128xf32>
    %36 = arith.subf %32, %35 : vector<8x128xf32>
    %37 = math.exp %36 : vector<8x128xf32>
    %cst_22 = arith.constant dense<0.000000e+00> : vector<8xf32>
    %38 = vector.multi_reduction <add>, %37, %cst_22 [1] : vector<8x128xf32> to vector<8xf32>
    %39 = vector.shape_cast %38 : vector<8xf32> to vector<8x1xf32>
    %40 = tpu.reciprocal %39 {approx = true} : vector<8x1xf32> -> vector<8x1xf32>
    %41 = vector.broadcast %40 : vector<8x1xf32> to vector<8x128xf32>
    %42 = arith.mulf %37, %41 : vector<8x128xf32>
    %c0_23 = arith.constant 0 : index
    %c0_24 = arith.constant 0 : index
    %43 = vector.load %arg8[%c0_23, %c0_24] : memref<8x128xf32, #tpu.memory_space<vmem>>, vector<8x128xf32>
    tpu.vector_store %arg8[%c0_23, %c0_24], %42 {strides = array<i32>} : memref<8x128xf32, #tpu.memory_space<vmem>>, vector<8x128xf32>,
    return
  }
  func.func @transform_0(%arg0: i32) -> (i32, i32) {
    %c0_i32 = arith.constant 0 : i32
    %c0_i32_0 = arith.constant 0 : i32
    return %arg0, %c0_i32 : i32, i32
  }
  func.func @transform_1(%arg0: i32) -> (i32, i32) {
    %c0_i32 = arith.constant 0 : i32
    %c0_i32_0 = arith.constant 0 : i32
    %c0_i32_1 = arith.constant 0 : i32
    return %c0_i32, %c0_i32_0 : i32, i32
  }
  func.func @transform_2(%arg0: i32) -> (i32, i32) {
    %c0_i32 = arith.constant 0 : i32
    %c0_i32_0 = arith.constant 0 : i32
    %c0_i32_1 = arith.constant 0 : i32
    return %c0_i32, %c0_i32_0 : i32, i32
  }
  func.func @transform_3(%arg0: i32) -> (i32, i32) {
    %c0_i32 = arith.constant 0 : i32
    %c0_i32_0 = arith.constant 0 : i32
    %c0_i32_1 = arith.constant 0 : i32
    return %c0_i32, %c0_i32_0 : i32, i32
  }
  func.func @transform_4(%arg0: i32) -> (i32, i32) {
    %c0_i32 = arith.constant 0 : i32
    %c0_i32_0 = arith.constant 0 : i32
    %c0_i32_1 = arith.constant 0 : i32
    return %c0_i32, %c0_i32_0 : i32, i32
  }
  func.func @transform_5(%arg0: i32) -> (i32, i32) {
    %c0_i32 = arith.constant 0 : i32
    %c0_i32_0 = arith.constant 0 : i32
    %c0_i32_1 = arith.constant 0 : i32
    return %c0_i32, %c0_i32_0 : i32, i32
  }
  func.func @transform_6(%arg0: i32) -> (i32, i32) {
    %c0_i32 = arith.constant 0 : i32
    %c0_i32_0 = arith.constant 0 : i32
    %c0_i32_1 = arith.constant 0 : i32
    return %c0_i32, %c0_i32_0 : i32, i32
  }
  func.func @transform_7(%arg0: i32) -> (i32, i32) {
    %c0_i32 = arith.constant 0 : i32
    %c0_i32_0 = arith.constant 0 : i32
    return %arg0, %c0_i32 : i32, i32
  }
}

</mosaic_0001>

<llo_original>
// kernel: policy_forward.1
$region0: #{policy_forward.1}
  #allocation0 [shape = 'u32[]', space=smem, size = 0x4, offset = 0x4, fixed_abs, tag = 'smem constant byte address 0x4 - core index']
  #allocation1 [shape = 'u32[144,128]{1,0:T(1,128)}', space=vmem, size = 0x12000, scoped, tag = 'internal scratch']
  %s0 = inlined_call_operand.vmem [shape: f32[8,16], index: 0, kind: input, shape index: {}]
  %s1 = inlined_call_operand.vmem [shape: bf16[16,128], index: 1, kind: input, shape index: {}]
  %s2 = inlined_call_operand.vmem [shape: f32[1,128], index: 2, kind: input, shape index: {}]
  %s3 = inlined_call_operand.vmem [shape: bf16[128,64], index: 3, kind: input, shape index: {}]
  %s4 = inlined_call_operand.vmem [shape: f32[1,64], index: 4, kind: input, shape index: {}]
  %s5 = inlined_call_operand.vmem [shape: bf16[64,128], index: 5, kind: input, shape index: {}]
  %s6 = inlined_call_operand.vmem [shape: f32[1,128], index: 6, kind: input, shape index: {}]
  %s7 = inlined_call_operand.vmem [shape: f32[8,128], index: 7, kind: output, shape index: {}]
  %s8 = sld [smem:[#allocation0]]
  $region38: #{policy_forward.1} parent=0
    _
  %s10 = ssub.s32 1, %s8
  %s11 = scalar_select 0, %s10, %s8
  // Predicated region
  $region2: #{policy_forward.1} parent=0 // pred_check
    _
  $region3: #{policy_forward.1} parent=0 // pred_check_branch
    %13 = sbr.rel (0) target = $region5
  $region4: #{policy_forward.1} parent=0 // pred_region
    _
  $region5: #{policy_forward.1} parent=0 // pred_fallthru
    _
  // Predicated region
  $region6: #{policy_forward.1} parent=0 // pred_check
    _
  $region7: #{policy_forward.1} parent=0 // pred_check_branch
    %15 = sbr.rel (0) target = $region9
  $region8: #{policy_forward.1} parent=0 // pred_region
    _
  $region9: #{policy_forward.1} parent=0 // pred_fallthru
    _
  // Predicated region
  $region10: #{policy_forward.1} parent=0 // pred_check
    _
  $region11: #{policy_forward.1} parent=0 // pred_check_branch
    %17 = sbr.rel (0) target = $region13
  $region12: #{policy_forward.1} parent=0 // pred_region
    _
  $region13: #{policy_forward.1} parent=0 // pred_fallthru
    _
  // Predicated region
  $region14: #{policy_forward.1} parent=0 // pred_check
    _
  $region15: #{policy_forward.1} parent=0 // pred_check_branch
    %19 = sbr.rel (0) target = $region17
  $region16: #{policy_forward.1} parent=0 // pred_region
    _
  $region17: #{policy_forward.1} parent=0 // pred_fallthru
    _
  // Predicated region
  $region18: #{policy_forward.1} parent=0 // pred_check
    _
  $region19: #{policy_forward.1} parent=0 // pred_check_branch
    %21 = sbr.rel (0) target = $region21
  $region20: #{policy_forward.1} parent=0 // pred_region
    _
  $region21: #{policy_forward.1} parent=0 // pred_fallthru
    _
  // Predicated region
  $region22: #{policy_forward.1} parent=0 // pred_check
    _
  $region23: #{policy_forward.1} parent=0 // pred_check_branch
    %23 = sbr.rel (0) target = $region25
  $region24: #{policy_forward.1} parent=0 // pred_region
    _
  $region25: #{policy_forward.1} parent=0 // pred_fallthru
    _
  // Predicated region
  $region26: #{policy_forward.1} parent=0 // pred_check
    _
  $region27: #{policy_forward.1} parent=0 // pred_check_branch
    %25 = sbr.rel (0) target = $region29
  $region28: #{policy_forward.1} parent=0 // pred_region
    _
  $region29: #{policy_forward.1} parent=0 // pred_fallthru
    _
  %v27 = vld [vmem:[%s0] sm:$0xff]
  %v28 = vpack.c.bf16 %v27, %v27
  %v29 = vld [vmem:[%s1] sm:$0xf]
  %v30 = vld [vmem:[%s1 + $0x4] sm:$0xf]
  %v31 = vld [vmem:[%s2] sm:$0x1]
  %v33 = vlaneseq
  %v34 = vshrl.u32 %v33, 7
  %v35 = vsub.s32 0, %v34
  %v36 = vrot.slane %v31, %v35
  %v40 = vunpack.c.l.b16 %v29
  %v41 = vunpack.c.l.b16 %v30
  %v42 = vpack.c.b16 %v41, %v40
  %vm44 = vcmask 130048
  %v46 = vsel %vm44, %v28, 0
  %48 = vmatprep.subr.bf16.mxu0 0
  %49 = vmatpush1.bf16.msra.mxu0 %v42
  %50 = vmatprep.subr.bf16.mxu0 0
  %51 = vmatpush1.bf16.msra.mxu0 0
  %52 = vmatprep.subr.bf16.mxu0 0
  %53 = vmatpush1.bf16.msra.mxu0 0
  %54 = vmatprep.subr.bf16.mxu0 0
  %55 = vmatpush1.bf16.msra.mxu0 0
  %56 = vmatprep.subr.bf16.mxu0 0
  %57 = vmatpush1.bf16.msra.mxu0 0
  %58 = vmatprep.subr.bf16.mxu0 0
  %59 = vmatpush1.bf16.msra.mxu0 0
  %60 = vmatprep.subr.bf16.mxu0 0
  %61 = vmatpush1.bf16.msra.mxu0 0
  %62 = vmatprep.subr.bf16.mxu0 0
  %63 = vmatpush1.bf16.msra.mxu0 0
  %64 = vmatprep.subr.bf16.mxu0 0
  %65 = vmatpush1.bf16.msra.mxu0 0
  %66 = vmatprep.subr.bf16.mxu0 0
  %67 = vmatpush1.bf16.msra.mxu0 0
  %68 = vmatprep.subr.bf16.mxu0 0
  %69 = vmatpush1.bf16.msra.mxu0 0
  %70 = vmatprep.subr.bf16.mxu0 0
  %71 = vmatpush1.bf16.msra.mxu0 0
  %72 = vmatprep.subr.bf16.mxu0 0
  %73 = vmatpush1.bf16.msra.mxu0 0
  %74 = vmatprep.subr.bf16.mxu0 0
  %75 = vmatpush1.bf16.msra.mxu0 0
  %76 = vmatprep.subr.bf16.mxu0 0
  %77 = vmatpush1.bf16.msra.mxu0 0
  %78 = vmatprep.subr.bf16.mxu0 0
  %79 = vmatpush1.bf16.msra.mxu0 0
  %80 = vmatprep.mubr.bf16.mxu0 0
  %81 = vmatmul.mubr.bf16.gmra.mrb[0].mxu0 %v46
  %v82 = vpop.f32.mrb[0].mxu0
  %v83 = vadd.f32 %v36, %v82
  %v84 = vpop.f32.mrb[0].mxu0
  %v85 = vpop.f32.mrb[0].mxu0
  %v86 = vpop.f32.mrb[0].mxu0
  %87 = vdwg.mxu0
  %v88 = vmul.f32 %v83, 0.5
  %v89 = vtanh.pop %v88
  %v90 = vadd.f32 %v89, 1.0
  %v91 = vmul.f32 %v90, 0.5
  %v92 = vpack.c.bf16 %v91, %v91
  %v93 = vld [vmem:[%s3] sm:$0xf]
  %v94 = vld [vmem:[%s3 + $0x4] sm:$0xf]
  %v95 = vld [vmem:[%s3 + $0x8] sm:$0xf]
  %v96 = vld [vmem:[%s3 + $0xc] sm:$0xf]
  %v97 = vld [vmem:[%s3 + $0x10] sm:$0xf]
  %v98 = vld [vmem:[%s3 + $0x14] sm:$0xf]
  %v99 = vld [vmem:[%s3 + $0x18] sm:$0xf]
  %v100 = vld [vmem:[%s3 + $0x1c] sm:$0xf]
  %v101 = vld [vmem:[%s3 + $0x20] sm:$0xf]
  %v102 = vld [vmem:[%s3 + $0x24] sm:$0xf]
  %v103 = vld [vmem:[%s3 + $0x28] sm:$0xf]
  %v104 = vld [vmem:[%s3 + $0x2c] sm:$0xf]
  %v105 = vld [vmem:[%s3 + $0x30] sm:$0xf]
  %v106 = vld [vmem:[%s3 + $0x34] sm:$0xf]
  %v107 = vld [vmem:[%s3 + $0x38] sm:$0xf]
  %v108 = vld [vmem:[%s3 + $0x3c] sm:$0xf]
  %v109 = vld [vmem:[%s4] sm:$0x1]
  %v111 = vlaneseq
  %v112 = vshrl.u32 %v111, 7
  %v113 = vsub.s32 0, %v112
  %v114 = vrot.slane %v109, %v113
  %v132 = vunpack.c.l.b16 %v93
  %v133 = vunpack.c.l.b16 %v94
  %v134 = vunpack.c.l.b16 %v95
  %v135 = vunpack.c.l.b16 %v96
  %v136 = vunpack.c.l.b16 %v97
  %v137 = vunpack.c.l.b16 %v98
  %v138 = vunpack.c.l.b16 %v99
  %v139 = vunpack.c.l.b16 %v100
  %v140 = vunpack.c.l.b16 %v101
  %v141 = vunpack.c.l.b16 %v102
  %v142 = vunpack.c.l.b16 %v103
  %v143 = vunpack.c.l.b16 %v104
  %v144 = vunpack.c.l.b16 %v105
  %v145 = vunpack.c.l.b16 %v106
  %v146 = vunpack.c.l.b16 %v107
  %v147 = vunpack.c.l.b16 %v108
  %v148 = vpack.c.b16 %v133, %v132
  %v149 = vpack.c.b16 %v135, %v134
  %v150 = vpack.c.b16 %v137, %v136
  %v151 = vpack.c.b16 %v139, %v138
  %v152 = vpack.c.b16 %v141, %v140
  %v153 = vpack.c.b16 %v143, %v142
  %v154 = vpack.c.b16 %v145, %v144
  %v155 = vpack.c.b16 %v147, %v146
  %164 = vmatprep.subr.bf16.mxu0 0
  %165 = vmatpush1.bf16.msra.mxu0 %v148
  %166 = vmatprep.subr.bf16.mxu0 0
  %167 = vmatpush1.bf16.msra.mxu0 %v149
  %168 = vmatprep.subr.bf16.mxu0 0
  %169 = vmatpush1.bf16.msra.mxu0 %v150
  %170 = vmatprep.subr.bf16.mxu0 0
  %171 = vmatpush1.bf16.msra.mxu0 %v151
  %172 = vmatprep.subr.bf16.mxu0 0
  %173 = vmatpush1.bf16.msra.mxu0 %v152
  %174 = vmatprep.subr.bf16.mxu0 0
  %175 = vmatpush1.bf16.msra.mxu0 %v153
  %176 = vmatprep.subr.bf16.mxu0 0
  %177 = vmatpush1.bf16.msra.mxu0 %v154
  %178 = vmatprep.subr.bf16.mxu0 0
  %179 = vmatpush1.bf16.msra.mxu0 %v155
  %180 = vmatprep.subr.bf16.mxu0 0
  %181 = vmatpush1.bf16.msra.mxu0 0
  %182 = vmatprep.subr.bf16.mxu0 0
  %183 = vmatpush1.bf16.msra.mxu0 0
  %184 = vmatprep.subr.bf16.mxu0 0
  %185 = vmatpush1.bf16.msra.mxu0 0
  %186 = vmatprep.subr.bf16.mxu0 0
  %187 = vmatpush1.bf16.msra.mxu0 0
  %188 = vmatprep.subr.bf16.mxu0 0
  %189 = vmatpush1.bf16.msra.mxu0 0
  %190 = vmatprep.subr.bf16.mxu0 0
  %191 = vmatpush1.bf16.msra.mxu0 0
  %192 = vmatprep.subr.bf16.mxu0 0
  %193 = vmatpush1.bf16.msra.mxu0 0
  %194 = vmatprep.subr.bf16.mxu0 0
  %195 = vmatpush1.bf16.msra.mxu0 0
  %196 = vmatprep.mubr.bf16.mxu0 0
  %197 = vmatmul.mubr.bf16.gmra.mrb[0].mxu0 %v92
  %v198 = vpop.f32.mrb[0].mxu0
  %v199 = vadd.f32 %v114, %v198
  %v200 = vpop.f32.mrb[0].mxu0
  %v201 = vpop.f32.mrb[0].mxu0
  %v202 = vpop.f32.mrb[0].mxu0
  %203 = vdwg.mxu0
  %v204 = vmul.f32 %v199, 0.5
  %v205 = vtanh.pop %v204
  %v206 = vadd.f32 %v205, 1.0
  %v207 = vmul.f32 %v206, 0.5
  %v208 = vpack.c.bf16 %v207, %v207
  %v209 = vld [vmem:[%s5] sm:$0xf]
  %v210 = vld [vmem:[%s5 + $0x4] sm:$0xf]
  %v211 = vld [vmem:[%s5 + $0x8] sm:$0xf]
  %v212 = vld [vmem:[%s5 + $0xc] sm:$0xf]
  %v213 = vld [vmem:[%s5 + $0x10] sm:$0xf]
  %v214 = vld [vmem:[%s5 + $0x14] sm:$0xf]
  %v215 = vld [vmem:[%s5 + $0x18] sm:$0xf]
  %v216 = vld [vmem:[%s5 + $0x1c] sm:$0xf]
  %v217 = vld [vmem:[%s6] sm:$0x1]
  %v219 = vlaneseq
  %v220 = vshrl.u32 %v219, 7
  %v221 = vsub.s32 0, %v220
  %v222 = vrot.slane %v217, %v221
  %v232 = vunpack.c.l.b16 %v209
  %v233 = vunpack.c.l.b16 %v210
  %v234 = vunpack.c.l.b16 %v211
  %v235 = vunpack.c.l.b16 %v212
  %v236 = vunpack.c.l.b16 %v213
  %v237 = vunpack.c.l.b16 %v214
  %v238 = vunpack.c.l.b16 %v215
  %v239 = vunpack.c.l.b16 %v216
  %v240 = vpack.c.b16 %v233, %v232
  %v241 = vpack.c.b16 %v235, %v234
  %v242 = vpack.c.b16 %v237, %v236
  %v243 = vpack.c.b16 %v239, %v238
  %vm248 = vcmask 523264
  %v250 = vsel %vm248, %v208, 0
  %252 = vmatprep.subr.bf16.mxu0 0
  %253 = vmatpush1.bf16.msra.mxu0 %v240
  %254 = vmatprep.subr.bf16.mxu0 0
  %255 = vmatpush1.bf16.msra.mxu0 %v241
  %256 = vmatprep.subr.bf16.mxu0 0
  %257 = vmatpush1.bf16.msra.mxu0 %v242
  %258 = vmatprep.subr.bf16.mxu0 0
  %259 = vmatpush1.bf16.msra.mxu0 %v243
  %260 = vmatprep.subr.bf16.mxu0 0
  %261 = vmatpush1.bf16.msra.mxu0 0
  %262 = vmatprep.subr.bf16.mxu0 0
  %263 = vmatpush1.bf16.msra.mxu0 0
  %264 = vmatprep.subr.bf16.mxu0 0
  %265 = vmatpush1.bf16.msra.mxu0 0
  %266 = vmatprep.subr.bf16.mxu0 0
  %267 = vmatpush1.bf16.msra.mxu0 0
  %268 = vmatprep.subr.bf16.mxu0 0
  %269 = vmatpush1.bf16.msra.mxu0 0
  %270 = vmatprep.subr.bf16.mxu0 0
  %271 = vmatpush1.bf16.msra.mxu0 0
  %272 = vmatprep.subr.bf16.mxu0 0
  %273 = vmatpush1.bf16.msra.mxu0 0
  %274 = vmatprep.subr.bf16.mxu0 0
  %275 = vmatpush1.bf16.msra.mxu0 0
  %276 = vmatprep.subr.bf16.mxu0 0
  %277 = vmatpush1.bf16.msra.mxu0 0
  %278 = vmatprep.subr.bf16.mxu0 0
  %279 = vmatpush1.bf16.msra.mxu0 0
  %280 = vmatprep.subr.bf16.mxu0 0
  %281 = vmatpush1.bf16.msra.mxu0 0
  %282 = vmatprep.subr.bf16.mxu0 0
  %283 = vmatpush1.bf16.msra.mxu0 0
  %284 = vmatprep.mubr.bf16.mxu0 0
  %285 = vmatmul.mubr.bf16.gmra.mrb[0].mxu0 %v250
  %v286 = vpop.f32.mrb[0].mxu0
  %v287 = vadd.f32 %v222, %v286
  %v288 = vpop.f32.mrb[0].mxu0
  %v289 = vpop.f32.mrb[0].mxu0
  %v290 = vpop.f32.mrb[0].mxu0
  %291 = vdwg.mxu0
  %292 = vmax.xlane.f32.xlu0 %v287
  %v293 = vpop.xlane.xlu0 %292
  %v294 = vsub.f32 %v287, %v293
  %v295 = vmul.f32 %v294, 1.442695
  %v296 = vpow.pop %v295
  %297 = vadd.xlane.f32.xlu0 %v296
  %v298 = vpop.xlane.xlu0 %297
  %v299 = vrcp.pop %v298
  %v300 = vmul.f32 %v296, %v299
  %301 = vst [vmem:[%s7] sm:$0xff] %v300
  // Predicated region
  $region30: #{policy_forward.1} parent=0 // pred_check
    _
  $region31: #{policy_forward.1} parent=0 // pred_check_branch
    %303 = sbr.rel (0) target = $region33
  $region32: #{policy_forward.1} parent=0 // pred_region
    _
  $region33: #{policy_forward.1} parent=0 // pred_fallthru
    _
  // Predicated region
  $region34: #{policy_forward.1} parent=0 // pred_check
    _
  $region35: #{policy_forward.1} parent=0 // pred_check_branch
    %305 = sbr.rel (0) target = $region37
  $region36: #{policy_forward.1} parent=0 // pred_region
    _
  $region37: #{policy_forward.1} parent=0 // pred_fallthru
    _

</llo_original>
